<compile_context>
chip_gen: v7x
topology: tpu7x:2x2x1
jax: 0.10.0
libtpu: 0.0.40
codegen_flags: <defaults>
</compile_context>

<pallas_src>
import jax
import jax.numpy as jnp
from jax.experimental import pallas as pl
from jax.experimental.pallas import tpu as pltpu


def _cdiv(a, b):
    return -(-a // b)


def _round_up(n, m):
    return ((n + m - 1) // m) * m


def _tpu_generation():
    try:
        kind = jax.devices()[0].device_kind.lower()
    except Exception:
        return "unknown"
    if "v5e" in kind or "v5 lite" in kind or "v5lite" in kind:
        return "v5e"
    if "v6" in kind:
        return "v6e"
    if "v7" in kind:
        return "v7x"
    return "unknown"


# Per-generation (max batch-tile lanes, vmem_limit_bytes).
# True double-buffered footprint (8-sublane padding) is ~128*BT bytes:
#   x block (3,BT)->(8,BT) f32 = 32*BT B/buffer, out block (1,BT)->(8,BT) =
#   32*BT B/buffer, two buffers each.
#   v5e:  BT= 64K ->  ~8 MiB  (well under the 16 MiB default scoped limit)
#   v6e:  BT=256K -> ~32 MiB  (128 MiB physical VMEM)
#   v7x:  BT=256K -> ~32 MiB  (64 MiB physical per TC -- do NOT reuse 512K)
_GEN_CONFIG = {
    "v5e": (64 * 1024, 32 << 20),
    "v6e": (256 * 1024, 64 << 20),
    "v7x": (256 * 1024, 48 << 20),
    "unknown": (128 * 1024, 32 << 20),
}


def _mlp_kernel(w1t_ref, b1_ref, w2_ref, b2_ref, x_ref, o_ref):
    # w1t_ref: (H, F)   b1_ref: (H, 1)   w2_ref: (H, 1)   b2_ref: (1, 1)
    # x_ref:   (F, BT)  batch along lanes (f32/bf16/f16 -> upcast to f32)
    # o_ref:   (1, BT)  f32
    x = x_ref[...].astype(jnp.float32)              # (F, BT)
    w1t = w1t_ref[...]                              # (H, F)
    f = x.shape[0]

    # Layer 1 on the VPU: h = relu(W1^T @ x + b1) as F broadcast mul+adds over
    # full (H=8, BT) vregs (static unroll, F == 3).  The sublane broadcasts of
    # the x rows are fully hidden under the x-tile DMA at the HBM roofline.
    acc = w1t[:, 0:1] * x[0:1, :]                   # (H, BT)
    for k in range(1, f):
        acc = acc + w1t[:, k:k + 1] * x[k:k + 1, :]
    h = jnp.maximum(acc + b1_ref[...], 0.0)         # (H, BT)

    # Layer 2: single output unit -> weight the rows, reduce over sublanes.
    z = jnp.sum(w2_ref[...] * h, axis=0, keepdims=True) + b2_ref[...]  # (1, BT)

    # Exact sigmoid: the kernel is DMA-bound, so the real divide is free and
    # keeps probabilities in [0, 1] (unlike the previous approx reciprocal).
    o_ref[...] = (1.0 / (1.0 + jnp.exp(-z))).astype(o_ref.dtype)


def _choose_tile(batch, bt_max):
    """Bounded-tail tile choice: waste < 128 lanes per tile, balanced tiles."""
    bt_max = max(128, int(bt_max))
    ntiles = _cdiv(batch, bt_max)
    bt = _round_up(_cdiv(batch, ntiles), 128)
    if bt >= batch:          # single full-array block (always layout-legal)
        bt = batch
    return bt, _cdiv(batch, bt)


def injury_risk_predictor_feature_major(x_fm, w1, b1, w2, b2, *, block_batch=None):
    """Fast path.  x_fm: (input_size, B) feature-major, f32/bf16/f16.

    Streams x straight from HBM (no pad, no transpose) and returns (B, 1) f32
    probabilities -- same math as the PyTorch module.
    """
    x_fm = jnp.asarray(x_fm)
    if x_fm.dtype not in (jnp.float32, jnp.bfloat16, jnp.float16):
        x_fm = x_fm.astype(jnp.float32)
    F, B = x_fm.shape
    H = jnp.asarray(w1).shape[1]

    gen = _tpu_generation()
    bt_max, vmem_limit = _GEN_CONFIG[gen]
    if block_batch is not None:
        bt_max = block_batch
    bt, num_tiles = _choose_tile(B, bt_max)

    # v7x has 2 TensorCores (64 MiB VMEM each); split the batch grid across
    # them explicitly.  On 1-TC chips plain "parallel" is equivalent.
    core_parallel = getattr(pltpu, "CORE_PARALLEL", None)
    if gen == "v7x" and num_tiles >= 2 and core_parallel is not None:
        dim_sems = (core_parallel,)
    else:
        dim_sems = ("parallel",)

    w1t = jnp.asarray(w1, jnp.float32).T.reshape(H, F)   # (H, F)
    b1c = jnp.asarray(b1, jnp.float32).reshape(H, 1)     # (H, 1)
    w2c = jnp.asarray(w2, jnp.float32).reshape(H, 1)     # (H, 1)
    b2c = jnp.asarray(b2, jnp.float32).reshape(1, 1)     # (1, 1)

    const = lambda shape: pl.BlockSpec(shape, lambda i: (0, 0))  # VMEM-resident

    out = pl.pallas_call(
        _mlp_kernel,
        out_shape=jax.ShapeDtypeStruct((1, B), jnp.float32),
        grid=(num_tiles,),
        in_specs=[
            const((H, F)),                               # W1^T
            const((H, 1)),                               # b1
            const((H, 1)),                               # w2
            const((1, 1)),                               # b2
            pl.BlockSpec((F, bt), lambda i: (0, i)),     # streamed x tile
        ],
        out_specs=pl.BlockSpec((1, bt), lambda i: (0, i)),
        compiler_params=pltpu.CompilerParams(
            dimension_semantics=dim_sems,
            vmem_limit_bytes=vmem_limit,
        ),
    )(w1t, b1c, w2c, b2c, x_fm)

    return out.reshape(B, 1)


def injury_risk_predictor(x, w1, b1, w2, b2, *, block_batch=None):
    """Compatibility path for PyTorch-layout x: (B, input_size) -> (B, 1).

    NOTE: the single `x.T` below is an extra XLA HBM round-trip (~24 B/sample
    on top of the kernel's ~16 B/sample).  For bulk scoring, store x
    feature-major upstream and call `injury_risk_predictor_feature_major`
    (or fuse the transpose into the producer) -- that is worth ~2-2.5x
    end-to-end on all generations.
    """
    x = jnp.asarray(x)
    return injury_risk_predictor_feature_major(
        x.T, w1, b1, w2, b2, block_batch=block_batch)


def init_params(key, input_size=3, hidden=8):
    # PyTorch nn.Linear default init: U(-1/sqrt(fan_in), 1/sqrt(fan_in)).
    k1, k2, k3, k4 = jax.random.split(key, 4)
    bound1 = 1.0 / jnp.sqrt(input_size)
    bound2 = 1.0 / jnp.sqrt(hidden)
    w1 = jax.random.uniform(k1, (input_size, hidden), jnp.float32, -bound1, bound1)
    b1 = jax.random.uniform(k2, (1, hidden), jnp.float32, -bound1, bound1)
    w2 = jax.random.uniform(k3, (hidden, 1), jnp.float32, -bound2, bound2)
    b2 = jax.random.uniform(k4, (1, 1), jnp.float32, -bound2, bound2)
    return w1, b1, w2, b2


if __name__ == "__main__":
    key = jax.random.PRNGKey(0)
    kx, kp = jax.random.split(key)

    input_size, hidden = 3, 8
    w1, b1, w2, b2 = init_params(kp, input_size=input_size, hidden=hidden)

    def ref(x):
        h = jnp.maximum(
            jnp.dot(x, w1, precision=jax.lax.Precision.HIGHEST) + b1, 0.0)
        return jax.nn.sigmoid(
            jnp.dot(h, w2, precision=jax.lax.Precision.HIGHEST) + b2)

    # Small "deployment-like" batch via the PyTorch-layout compatibility path
    # (single full-array block, lane dim == B).
    x_small = jax.random.normal(kx, (2, input_size), jnp.float32)
    out_small = jax.block_until_ready(injury_risk_predictor(x_small, w1, b1, w2, b2))
    assert out_small.shape == (2, 1)
    assert jnp.allclose(out_small, ref(x_small), atol=2e-3), (out_small, ref(x_small))

    # Feature-major fast path exercising the grid: 3 lane-dense tiles with a
    # partial (masked-edge) final tile -- no padding anywhere.
    x_big = jax.random.normal(jax.random.PRNGKey(1), (300, input_size), jnp.float32)
    out_big = jax.block_until_ready(
        injury_risk_predictor_feature_major(
            x_big.T, w1, b1, w2, b2, block_batch=128))
    assert out_big.shape == (300, 1)
    assert jnp.allclose(out_big, ref(x_big), atol=2e-3)

    # bf16-streamed input (bandwidth lever for bulk scoring); kernel upcasts.
    out_bf16 = jax.block_until_ready(
        injury_risk_predictor_feature_major(
            x_big.T.astype(jnp.bfloat16), w1, b1, w2, b2, block_batch=256))
    assert out_bf16.shape == (300, 1)
    assert jnp.allclose(out_bf16, ref(x_big), atol=2e-2)

    print("KERNEL_OK")
</pallas_src>

<mosaic_0001>
module attributes {stable_mosaic.version = 11 : i64} {
  func.func @_mlp_kernel(%arg0: i32, %arg1: memref<8x3xf32, #tpu.memory_space<vmem>>, %arg2: memref<8x1xf32, #tpu.memory_space<vmem>>, %arg3: memref<8x1xf32, #tpu.memory_space<vmem>>, %arg4: memref<1x1xf32, #tpu.memory_space<vmem>>, %arg5: memref<3x2xf32, #tpu.memory_space<vmem>>, %arg6: memref<1x2xf32, #tpu.memory_space<vmem>>) attributes {dimension_semantics = [#tpu.dimension_semantics<parallel>], iteration_bounds = array<i64: 1>, scalar_prefetch = 0 : i64, scratch_operands = 0 : i64, tpu.core_type = #tpu.core_type<tc>, window_params = [{pipeline_mode = #tpu.pipeline_mode<synchronous>, transform_indices = @transform_0, window_bounds = array<i64: 8, 3>}, {pipeline_mode = #tpu.pipeline_mode<synchronous>, transform_indices = @transform_1, window_bounds = array<i64: 8, 1>}, {pipeline_mode = #tpu.pipeline_mode<synchronous>, transform_indices = @transform_2, window_bounds = array<i64: 8, 1>}, {pipeline_mode = #tpu.pipeline_mode<synchronous>, transform_indices = @transform_3, window_bounds = array<i64: 1, 1>}, {transform_indices = @transform_4, window_bounds = array<i64: 3, 2>}, {transform_indices = @transform_5, window_bounds = array<i64: 1, 2>}]} {
    %c0 = arith.constant 0 : index
    %c0_0 = arith.constant 0 : index
    %0 = vector.load %arg5[%c0, %c0_0] : memref<3x2xf32, #tpu.memory_space<vmem>>, vector<3x2xf32>
    %c0_1 = arith.constant 0 : index
    %c0_2 = arith.constant 0 : index
    %1 = vector.load %arg1[%c0_1, %c0_2] : memref<8x3xf32, #tpu.memory_space<vmem>>, vector<8x3xf32>
    %2 = vector.extract_strided_slice %1 {offsets = [0, 0], sizes = [8, 1], strides = [1, 1]} : vector<8x3xf32> to vector<8x1xf32>
    %3 = vector.extract_strided_slice %0 {offsets = [0, 0], sizes = [1, 2], strides = [1, 1]} : vector<3x2xf32> to vector<1x2xf32>
    %4 = vector.broadcast %2 : vector<8x1xf32> to vector<8x2xf32>
    %5 = vector.broadcast %3 : vector<1x2xf32> to vector<8x2xf32>
    %6 = arith.mulf %4, %5 : vector<8x2xf32>
    %7 = vector.extract_strided_slice %1 {offsets = [0, 1], sizes = [8, 1], strides = [1, 1]} : vector<8x3xf32> to vector<8x1xf32>
    %8 = vector.extract_strided_slice %0 {offsets = [1, 0], sizes = [1, 2], strides = [1, 1]} : vector<3x2xf32> to vector<1x2xf32>
    %9 = vector.broadcast %7 : vector<8x1xf32> to vector<8x2xf32>
    %10 = vector.broadcast %8 : vector<1x2xf32> to vector<8x2xf32>
    %11 = arith.mulf %9, %10 : vector<8x2xf32>
    %12 = arith.addf %6, %11 : vector<8x2xf32>
    %13 = vector.extract_strided_slice %1 {offsets = [0, 2], sizes = [8, 1], strides = [1, 1]} : vector<8x3xf32> to vector<8x1xf32>
    %14 = vector.extract_strided_slice %0 {offsets = [2, 0], sizes = [1, 2], strides = [1, 1]} : vector<3x2xf32> to vector<1x2xf32>
    %15 = vector.broadcast %13 : vector<8x1xf32> to vector<8x2xf32>
    %16 = vector.broadcast %14 : vector<1x2xf32> to vector<8x2xf32>
    %17 = arith.mulf %15, %16 : vector<8x2xf32>
    %18 = arith.addf %12, %17 : vector<8x2xf32>
    %c0_3 = arith.constant 0 : index
    %c0_4 = arith.constant 0 : index
    %19 = vector.load %arg2[%c0_3, %c0_4] : memref<8x1xf32, #tpu.memory_space<vmem>>, vector<8x1xf32>
    %20 = vector.broadcast %19 : vector<8x1xf32> to vector<8x2xf32>
    %21 = arith.addf %18, %20 : vector<8x2xf32>
    %cst = arith.constant 0.000000e+00 : f32
    %22 = vector.broadcast %cst : f32 to vector<8x2xf32>
    %23 = arith.maximumf %21, %22 : vector<8x2xf32>
    %c0_5 = arith.constant 0 : index
    %c0_6 = arith.constant 0 : index
    %24 = vector.load %arg3[%c0_5, %c0_6] : memref<8x1xf32, #tpu.memory_space<vmem>>, vector<8x1xf32>
    %25 = vector.broadcast %24 : vector<8x1xf32> to vector<8x2xf32>
    %26 = arith.mulf %25, %23 : vector<8x2xf32>
    %cst_7 = arith.constant dense<0.000000e+00> : vector<2xf32>
    %27 = vector.multi_reduction <add>, %26, %cst_7 [0] : vector<8x2xf32> to vector<2xf32>
    %28 = vector.shape_cast %27 : vector<2xf32> to vector<1x2xf32>
    %c0_8 = arith.constant 0 : index
    %c0_9 = arith.constant 0 : index
    %29 = vector.load %arg4[%c0_8, %c0_9] : memref<1x1xf32, #tpu.memory_space<vmem>>, vector<1x1xf32>
    %30 = vector.broadcast %29 : vector<1x1xf32> to vector<1x2xf32>
    %31 = arith.addf %28, %30 : vector<1x2xf32>
    %cst_10 = arith.constant 0.000000e+00 : f32
    %32 = vector.broadcast %cst_10 : f32 to vector<1x2xf32>
    %33 = arith.subf %32, %31 : vector<1x2xf32>
    %34 = math.exp %33 : vector<1x2xf32>
    %cst_11 = arith.constant 1.000000e+00 : f32
    %35 = vector.broadcast %cst_11 : f32 to vector<1x2xf32>
    %36 = arith.addf %35, %34 : vector<1x2xf32>
    %cst_12 = arith.constant 1.000000e+00 : f32
    %37 = vector.broadcast %cst_12 : f32 to vector<1x2xf32>
    %38 = arith.divf %37, %36 : vector<1x2xf32>
    %c0_13 = arith.constant 0 : index
    %c0_14 = arith.constant 0 : index
    %39 = vector.load %arg6[%c0_13, %c0_14] : memref<1x2xf32, #tpu.memory_space<vmem>>, vector<1x2xf32>
    tpu.vector_store %arg6[%c0_13, %c0_14], %38 {strides = array<i32>} : memref<1x2xf32, #tpu.memory_space<vmem>>, vector<1x2xf32>,
    return
  }
  func.func @transform_0(%arg0: i32) -> (i32, i32) {
    %c0_i32 = arith.constant 0 : i32
    %c0_i32_0 = arith.constant 0 : i32
    %c0_i32_1 = arith.constant 0 : i32
    return %c0_i32, %c0_i32_0 : i32, i32
  }
  func.func @transform_1(%arg0: i32) -> (i32, i32) {
    %c0_i32 = arith.constant 0 : i32
    %c0_i32_0 = arith.constant 0 : i32
    %c0_i32_1 = arith.constant 0 : i32
    return %c0_i32, %c0_i32_0 : i32, i32
  }
  func.func @transform_2(%arg0: i32) -> (i32, i32) {
    %c0_i32 = arith.constant 0 : i32
    %c0_i32_0 = arith.constant 0 : i32
    %c0_i32_1 = arith.constant 0 : i32
    return %c0_i32, %c0_i32_0 : i32, i32
  }
  func.func @transform_3(%arg0: i32) -> (i32, i32) {
    %c0_i32 = arith.constant 0 : i32
    %c0_i32_0 = arith.constant 0 : i32
    %c0_i32_1 = arith.constant 0 : i32
    return %c0_i32, %c0_i32_0 : i32, i32
  }
  func.func @transform_4(%arg0: i32) -> (i32, i32) {
    %c0_i32 = arith.constant 0 : i32
    %c0_i32_0 = arith.constant 0 : i32
    return %c0_i32, %arg0 : i32, i32
  }
  func.func @transform_5(%arg0: i32) -> (i32, i32) {
    %c0_i32 = arith.constant 0 : i32
    %c0_i32_0 = arith.constant 0 : i32
    return %c0_i32, %arg0 : i32, i32
  }
}

</mosaic_0001>

<llo_original>
// kernel: tpu_custom_call.1
$region0: #{tpu_custom_call.1}
  #allocation0 [shape = 'u32[]', space=smem, size = 0x4, offset = 0x4, fixed_abs, tag = 'smem constant byte address 0x4 - core index']
  #allocation1 [shape = 'u32[144,128]{1,0:T(1,128)}', space=vmem, size = 0x12000, scoped, tag = 'internal scratch']
  #allocation2 [shape = 'f32[1,1]{1,0:T(1,128)S(1)}', space=vmem, size = 0x200, scoped, tag = 'scoped memory for tpu_custom_call.1']
  %s0 = inlined_call_operand.vmem [shape: f32[8,3], index: 0, kind: input, shape index: {}]
  %s1 = inlined_call_operand.vmem [shape: f32[8,1], index: 1, kind: input, shape index: {}]
  %s2 = inlined_call_operand.vmem [shape: f32[8,1], index: 2, kind: input, shape index: {}]
  %s3 = inlined_call_operand.<no memory space> [shape: f32[1,1], index: 3, kind: input, shape index: {}]
  %s4 = inlined_call_operand.vmem [shape: f32[3,2], index: 4, kind: input, shape index: {}]
  %s5 = inlined_call_operand.hbm [shape: f32[1,2], index: 5, kind: output, shape index: {}]
  %s6 = sld [smem:[#allocation0]]
  $region30: #{tpu_custom_call.1} parent=0
    _
  %s8 = ssub.s32 1, %s6
  %s9 = scalar_select 0, %s8, %s6
  %v10 = vstv %s3
  %11 = vst [vmem:[#allocation2] sm:$0x1] %v10
  $region1: #{tpu_custom_call.1} parent=0
    #allocation3 [shape = 'u8[512]{0}', space=vmem, size = 0x400, scoped, tag = 'output window, operand 0, single buffered']
    #allocation4 [shape = 's32[1]{0}', space=sflag, size = 0x4, scoped, tag = 'scoped memory for tpu_custom_call.1']
    %12 = vsyncpa [#allocation4], 0
    // Predicated region
    $region2: #{tpu_custom_call.1} parent=1 // pred_check
      _
    $region3: #{tpu_custom_call.1} parent=1 // pred_check_branch
      %14 = sbr.rel (0) target = $region5
    $region4: #{tpu_custom_call.1} parent=1 // pred_region
      _
    $region5: #{tpu_custom_call.1} parent=1 // pred_fallthru
      _
    // Predicated region
    $region6: #{tpu_custom_call.1} parent=1 // pred_check
      _
    $region7: #{tpu_custom_call.1} parent=1 // pred_check_branch
      %16 = sbr.rel (0) target = $region9
    $region8: #{tpu_custom_call.1} parent=1 // pred_region
      _
    $region9: #{tpu_custom_call.1} parent=1 // pred_fallthru
      _
    // Predicated region
    $region10: #{tpu_custom_call.1} parent=1 // pred_check
      _
    $region11: #{tpu_custom_call.1} parent=1 // pred_check_branch
      %18 = sbr.rel (0) target = $region13
    $region12: #{tpu_custom_call.1} parent=1 // pred_region
      _
    $region13: #{tpu_custom_call.1} parent=1 // pred_fallthru
      _
    // Predicated region
    $region14: #{tpu_custom_call.1} parent=1 // pred_check
      _
    $region15: #{tpu_custom_call.1} parent=1 // pred_check_branch
      %20 = sbr.rel (0) target = $region17
    $region16: #{tpu_custom_call.1} parent=1 // pred_region
      _
    $region17: #{tpu_custom_call.1} parent=1 // pred_fallthru
      _
    // Predicated region
    $region18: #{tpu_custom_call.1} parent=1 // pred_check
      _
    $region19: #{tpu_custom_call.1} parent=1 // pred_check_branch
      %22 = sbr.rel (0) target = $region21
    $region20: #{tpu_custom_call.1} parent=1 // pred_region
      _
    $region21: #{tpu_custom_call.1} parent=1 // pred_fallthru
      _
    %v23 = vld [vmem:[%s4] sm:$0x7]
    %v24 = vld [vmem:[%s0] sm:$0xff]
    %26 = vset.pattern.permute.xlu0 0
    %27 = vperm.xlu0 %26, %v24
    %v28 = vpop.permute.xlu0 %27
    %v30 = vlaneseq
    %v31 = vshrl.u32 %v30, 7
    %v32 = vsub.s32 0, %v31
    %v33 = vrot.slane %v23, %v32
    %v34 = vmul.f32 %v28, %v33
    %35 = vset.pattern.permute.xlu0 1
    %36 = vperm.xlu0 %35, %v24
    %v37 = vpop.permute.xlu0 %36
    %v39 = vlaneseq
    %v40 = vshrl.u32 %v39, 7
    %v41 = vsub.s32 1, %v40
    %v42 = vrot.slane %v23, %v41
    %v43 = vmul.f32 %v37, %v42
    %v44 = vadd.f32 %v34, %v43
    %45 = vset.pattern.permute.xlu0 2
    %46 = vperm.xlu0 %45, %v24
    %v47 = vpop.permute.xlu0 %46
    %v49 = vlaneseq
    %v50 = vshrl.u32 %v49, 7
    %v51 = vsub.s32 2, %v50
    %v52 = vrot.slane %v23, %v51
    %v53 = vmul.f32 %v47, %v52
    %v54 = vadd.f32 %v44, %v53
    %v55 = vld [vmem:[%s1] sm:$0xff]
    %57 = vset.pattern.permute.xlu0 0
    %58 = vperm.xlu0 %57, %v55
    %v59 = vpop.permute.xlu0 %58
    %v61 = vadd.f32 %v54, %v59
    %v62 = vmax.f32 %v61, 0.0
    %v63 = vld [vmem:[%s2] sm:$0xff]
    %65 = vset.pattern.permute.xlu0 0
    %66 = vperm.xlu0 %65, %v63
    %v67 = vpop.permute.xlu0 %66
    %v69 = vmul.f32 %v67, %v62
    %vm70 = vcmask 15360
    %v71 = vsel %vm70, %v69, 0.0
    %v72 = vrot.slane %v71, 4
    %v73 = vadd.f32 %v71, %v72
    %v74 = vrot.slane %v73, 2
    %v75 = vadd.f32 %v73, %v74
    %v76 = vrot.slane %v75, 1
    %v77 = vadd.f32 %v75, %v76
    %v78 = vld [vmem:[#allocation2] sm:$0x1]
    %80 = vset.pattern.permute.xlu0 0
    %81 = vperm.xlu0 %80, %v78
    %v82 = vpop.permute.xlu0 %81
    %v84 = vlaneseq
    %v85 = vshrl.u32 %v84, 7
    %v86 = vsub.s32 0, %v85
    %v87 = vrot.slane %v82, %v86
    %v88 = vadd.f32 %v77, %v87
    %v89 = vsub.f32 0.0, %v88
    %v90 = vmul.f32 %v89, 1.442695
    %v91 = vpow.pop %v90
    %v92 = vadd.f32 %v91, 1.0
    %v93 = vrcp.pop %v92
    %v94 = vmul.f32 1.0, %v93
    %vm95 = vcmask 8192
    %96 = vst.msk [vmem:[#allocation3] sm:$0x1] %vm95, %v94
    // Predicated region
    $region22: #{tpu_custom_call.1} parent=1 // pred_check
      _
    $region23: #{tpu_custom_call.1} parent=1 // pred_check_branch
      %98 = sbr.rel (0) target = $region25
    $region24: #{tpu_custom_call.1} parent=1 // pred_region
      %s100 = ssub.s32 16, 16
      %101 = vsyncadd [#allocation4], %s100
      %s103 = sshll.u32 [#allocation3], 4
      %s104 = int_to_ptr.vmem [resolvable:$true] %s103
      %106 = dma.vmem_to_hbm [thread:$0]  %s104, 16, %s5, [#allocation4]
    $region25: #{tpu_custom_call.1} parent=1 // pred_fallthru
      _
    // Predicated region
    $region26: #{tpu_custom_call.1} parent=1 // pred_check
      _
    $region27: #{tpu_custom_call.1} parent=1 // pred_check_branch
      %108 = sbr.rel (0) target = $region29
    $region28: #{tpu_custom_call.1} parent=1 // pred_region
      %109 = dma.done [#allocation4], 16
    $region29: #{tpu_custom_call.1} parent=1 // pred_fallthru
      _
    %110 = vsyncpa [#allocation4], 1

</llo_original>
